<compile_context>
chip_gen: v7x
topology: tpu7x:2x2x1
jax: 0.10.0
libtpu: 0.0.40
codegen_flags: <defaults>
</compile_context>

<pallas_src>
import functools

import jax
import jax.numpy as jnp
from jax.experimental import pallas as pl
from jax.experimental.pallas import tpu as pltpu


# -----------------------------------------------------------------------------
# Pallas kernel: one grid step == one relation, fused 3-layer GAT stack.
# -----------------------------------------------------------------------------
def _mentalnet_kernel(x_ref, w0_ref, w1_ref, w2_ref, b_ref, adj_ref, out_ref,
                      *, hidden):
    x = x_ref[...]                       # (N, F_in)
    adj = adj_ref[0]                     # (N_dst, N_src) dense weighted adjacency
    mask = adj > 0.0
    biases = b_ref[0]                    # (3, H)
    neg_inf = jnp.float32(-1e30)

    def gat(x_in, w_ext, layer_idx, apply_relu):
        # Fused linear transform: one MXU pass gives h, e_dst and e_src.
        #   w_ext = [ W | W @ a_dst | W @ a_src ]   -> (F_in, H + 2)
        h_ext = jnp.dot(x_in, w_ext, preferred_element_type=jnp.float32)
        h = h_ext[:, :hidden]                        # (N, H)
        e_dst = h_ext[:, hidden:hidden + 1]          # (N, 1)
        e_src = h_ext[:, hidden + 1:hidden + 2]      # (N, 1)

        # Attention logits + LeakyReLU(0.2).
        # TODO(synk): e_src.T is a single tiny (N,1)->(1,N) XLU relayout per
        # layer; a trans_b matmul could remove it at large N.
        logits = e_dst + e_src.T                     # (N_dst, N_src)
        logits = jnp.maximum(logits, 0.2 * logits)

        # Edge-weighted masked softmax over source nodes (single select;
        # masked entries underflow to 0 and are also zeroed by adj).
        masked = jnp.where(mask, logits, neg_inf)
        row_max = jnp.max(masked, axis=1, keepdims=True)
        p = adj * jnp.exp(masked - row_max)          # (N, N) unnormalized
        denom = jnp.sum(p, axis=1, keepdims=True)    # (N, 1) > 0 (self loops)

        # Aggregate first, normalize after (scales (N,H) instead of (N,N)).
        agg = jnp.dot(p, h, preferred_element_type=jnp.float32)
        inv = pl.reciprocal(denom, approx=True)      # EUP slot
        inv = inv * (2.0 - denom * inv)              # one Newton step
        out = agg * inv + biases[layer_idx:layer_idx + 1, :]
        if apply_relu:
            out = jnp.maximum(out, 0.0)
        return out

    h1 = gat(x, w0_ref[0], 0, apply_relu=True)
    h2 = gat(h1, w1_ref[0], 1, apply_relu=True)
    h3 = gat(h2, w2_ref[0], 2, apply_relu=False)
    out_ref[0] = h3


# -----------------------------------------------------------------------------
# Wrapper: single pallas_call over all relations + final concat reshape.
# -----------------------------------------------------------------------------
def mentalnet_naive_forward(features, adj_stack, w0, w1, w2, biases, *, hidden):
    """features: (N, F_in); adj_stack: (R, N, N); w0: (R, F_in, H+2);
    w1/w2: (R, H, H+2); biases: (R, 3, H). Returns (N, R*H)."""
    num_rel = adj_stack.shape[0]
    n, f_in = features.shape
    hp2 = hidden + 2
    # TODO(synk): for large N, tile the (N,N) adjacency with an online-softmax
    # inner loop (flash-attention style) to stay within v7x's 64 MiB VMEM.
    kernel = functools.partial(_mentalnet_kernel, hidden=hidden)
    out = pl.pallas_call(
        kernel,
        out_shape=jax.ShapeDtypeStruct((num_rel, n, hidden), jnp.float32),
        grid=(num_rel,),
        in_specs=[
            pl.BlockSpec((n, f_in), lambda r: (0, 0)),            # features
            pl.BlockSpec((1, f_in, hp2), lambda r: (r, 0, 0)),     # layer-0 W_ext
            pl.BlockSpec((1, hidden, hp2), lambda r: (r, 0, 0)),   # layer-1 W_ext
            pl.BlockSpec((1, hidden, hp2), lambda r: (r, 0, 0)),   # layer-2 W_ext
            pl.BlockSpec((1, 3, hidden), lambda r: (r, 0, 0)),     # biases
            pl.BlockSpec((1, n, n), lambda r: (r, 0, 0)),          # adjacency
        ],
        out_specs=pl.BlockSpec((1, n, hidden), lambda r: (r, 0, 0)),
        compiler_params=pltpu.CompilerParams(
            dimension_semantics=("parallel",)),                    # v7x: 2 TCs
    )(features, w0, w1, w2, biases, adj_stack)
    # Concat along the feature dim == transpose + reshape of the stacked output.
    return jnp.transpose(out, (1, 0, 2)).reshape(n, num_rel * hidden)


def pack_params(params, relations, hidden):
    """Fold a_src / a_dst into the layer weights and stack across relations."""
    w0, w1, w2, biases = [], [], [], []
    for relation in relations:
        layers = params[relation]
        fused = []
        for layer in layers:
            w = layer["w"]
            w_ext = jnp.concatenate(
                [w, w @ layer["a_dst"], w @ layer["a_src"]], axis=1)
            fused.append(w_ext)
        w0.append(fused[0])
        w1.append(fused[1])
        w2.append(fused[2])
        biases.append(jnp.concatenate([l["bias"] for l in layers], axis=0))
    return (jnp.stack(w0), jnp.stack(w1), jnp.stack(w2), jnp.stack(biases))


# -----------------------------------------------------------------------------
# Pure-JAX reference (for correctness check).
# -----------------------------------------------------------------------------
def _gat_layer_ref(x, w, a_src, a_dst, bias, adj, apply_relu):
    h = x @ w
    logits = (h @ a_dst) + (h @ a_src).T
    logits = jnp.where(logits > 0, logits, 0.2 * logits)
    mask = adj > 0.0
    masked = jnp.where(mask, logits, -1e30)
    row_max = jnp.max(masked, axis=1, keepdims=True)
    p = adj * jnp.exp(jnp.where(mask, logits - row_max, -1e30))
    alpha = p / jnp.sum(p, axis=1, keepdims=True)
    out = alpha @ h + bias
    return jnp.maximum(out, 0.0) if apply_relu else out


def mentalnet_naive_ref(features, adj_dict, params):
    outs = []
    for relation, adj in adj_dict.items():
        x = features
        layers = params[relation]
        for i, layer in enumerate(layers):
            x = _gat_layer_ref(x, layer["w"], layer["a_src"], layer["a_dst"],
                               layer["bias"], adj, i != len(layers) - 1)
        outs.append(x)
    return jnp.concatenate(outs, axis=1)


# -----------------------------------------------------------------------------
# Deterministic parameter / input construction.
# -----------------------------------------------------------------------------
def build_params(key, relations, in_features, hidden):
    params = {}
    for r, relation in enumerate(relations):
        layers = []
        for layer_idx in range(3):
            f_in = in_features if layer_idx == 0 else hidden
            k = jax.random.fold_in(jax.random.fold_in(key, r), layer_idx)
            kw, ks, kd, kb = jax.random.split(k, 4)
            layers.append({
                "w": 0.1 * jax.random.normal(kw, (f_in, hidden), jnp.float32),
                "a_src": 0.1 * jax.random.normal(ks, (hidden, 1), jnp.float32),
                "a_dst": 0.1 * jax.random.normal(kd, (hidden, 1), jnp.float32),
                "bias": 0.01 * jax.random.normal(kb, (1, hidden), jnp.float32),
            })
        params[relation] = layers
    return params


def build_graph(key, relations, num_nodes, num_edges):
    """Dense weighted adjacency per relation with self loops (weight 1.0)."""
    adj_dict = {}
    for r, relation in enumerate(relations):
        k = jax.random.fold_in(key, 100 + r)
        ksrc, kdst, kwgt = jax.random.split(k, 3)
        src = jax.random.randint(ksrc, (num_edges,), 0, num_nodes)
        dst = jax.random.randint(kdst, (num_edges,), 0, num_nodes)
        wgt = jax.random.uniform(kwgt, (num_edges,), jnp.float32, 0.1, 1.0)
        adj = jnp.zeros((num_nodes, num_nodes), jnp.float32)
        adj = adj.at[dst, src].set(wgt)          # messages flow src -> dst
        adj = adj.at[jnp.arange(num_nodes), jnp.arange(num_nodes)].set(1.0)
        adj_dict[relation] = adj
    return adj_dict


if __name__ == "__main__":
    key = jax.random.PRNGKey(0)

    num_nodes = 16          # users in the hetero graph
    in_features = 8         # x_dict['user'] feature dim
    hidden = 64             # config.gnn_hidden_channel (head expects 64 * 3)
    num_edges = 40
    relations = ("reply", "mention", "quote")   # config.hetero_relations

    k_feat, k_param, k_graph = jax.random.split(key, 3)
    features = jax.random.normal(k_feat, (num_nodes, in_features), jnp.float32)
    params = build_params(k_param, relations, in_features, hidden)
    adj_dict = build_graph(k_graph, relations, num_nodes, num_edges)

    adj_stack = jnp.stack([adj_dict[r] for r in relations])
    w0, w1, w2, biases = pack_params(params, relations, hidden)

    out = mentalnet_naive_forward(features, adj_stack, w0, w1, w2, biases,
                                  hidden=hidden)
    out = jax.block_until_ready(out)

    ref = mentalnet_naive_ref(features, adj_dict, params)
    assert out.shape == (num_nodes, hidden * len(relations)), out.shape
    assert jnp.allclose(out, ref, atol=1e-4, rtol=1e-4), \
        float(jnp.max(jnp.abs(out - ref)))

    # TODO(synk): depression_prediction_head (Linear(64*3, 1)) is unused in the
    # reference forward(), so it is intentionally not implemented.
    print("KERNEL_OK")
</pallas_src>

<mosaic_0001>
module attributes {stable_mosaic.version = 11 : i64} {
  func.func @_mentalnet_kernel(%arg0: i32, %arg1: memref<16x8xf32, #tpu.memory_space<vmem>>, %arg2: memref<1x8x66xf32, #tpu.memory_space<vmem>>, %arg3: memref<1x64x66xf32, #tpu.memory_space<vmem>>, %arg4: memref<1x64x66xf32, #tpu.memory_space<vmem>>, %arg5: memref<1x3x64xf32, #tpu.memory_space<vmem>>, %arg6: memref<1x16x16xf32, #tpu.memory_space<vmem>>, %arg7: memref<1x16x64xf32, #tpu.memory_space<vmem>>) attributes {dimension_semantics = [#tpu.dimension_semantics<parallel>], iteration_bounds = array<i64: 3>, scalar_prefetch = 0 : i64, scratch_operands = 0 : i64, tpu.core_type = #tpu.core_type<tc>, window_params = [{pipeline_mode = #tpu.pipeline_mode<synchronous>, transform_indices = @transform_0, window_bounds = array<i64: 16, 8>}, {transform_indices = @transform_1, window_bounds = array<i64: 1, 8, 66>}, {transform_indices = @transform_2, window_bounds = array<i64: 1, 64, 66>}, {transform_indices = @transform_3, window_bounds = array<i64: 1, 64, 66>}, {transform_indices = @transform_4, window_bounds = array<i64: 1, 3, 64>}, {transform_indices = @transform_5, window_bounds = array<i64: 1, 16, 16>}, {transform_indices = @transform_6, window_bounds = array<i64: 1, 16, 64>}]} {
    %c0 = arith.constant 0 : index
    %c0_0 = arith.constant 0 : index
    %0 = vector.load %arg1[%c0, %c0_0] : memref<16x8xf32, #tpu.memory_space<vmem>>, vector<16x8xf32>
    %c0_1 = arith.constant 0 : index
    %c0_2 = arith.constant 0 : index
    %c0_3 = arith.constant 0 : index
    %1 = vector.load %arg6[%c0_1, %c0_2, %c0_3] : memref<1x16x16xf32, #tpu.memory_space<vmem>>, vector<1x16x16xf32>
    %2 = vector.shape_cast %1 : vector<1x16x16xf32> to vector<16x16xf32>
    %cst = arith.constant 0.000000e+00 : f32
    %3 = vector.broadcast %cst : f32 to vector<16x16xf32>
    %4 = arith.cmpf ogt, %2, %3 : vector<16x16xf32>
    %c0_4 = arith.constant 0 : index
    %c0_5 = arith.constant 0 : index
    %c0_6 = arith.constant 0 : index
    %5 = vector.load %arg5[%c0_4, %c0_5, %c0_6] : memref<1x3x64xf32, #tpu.memory_space<vmem>>, vector<1x3x64xf32>
    %6 = vector.shape_cast %5 : vector<1x3x64xf32> to vector<3x64xf32>
    %c0_7 = arith.constant 0 : index
    %c0_8 = arith.constant 0 : index
    %c0_9 = arith.constant 0 : index
    %7 = vector.load %arg2[%c0_7, %c0_8, %c0_9] : memref<1x8x66xf32, #tpu.memory_space<vmem>>, vector<1x8x66xf32>
    %8 = vector.shape_cast %7 : vector<1x8x66xf32> to vector<8x66xf32>
    %cst_10 = arith.constant dense<0.000000e+00> : vector<16x66xf32>
    %9 = tpu.matmul %0, %8, %cst_10 {dimension_numbers = #tpu.dot_dimension_numbers<[1], [0], [0], [1], [0, 0, 1, 1], [], []>} : vector<16x8xf32>, vector<8x66xf32>, vector<16x66xf32> -> vector<16x66xf32>
    %10 = vector.extract_strided_slice %9 {offsets = [0, 0], sizes = [16, 64], strides = [1, 1]} : vector<16x66xf32> to vector<16x64xf32>
    %11 = vector.extract_strided_slice %9 {offsets = [0, 64], sizes = [16, 1], strides = [1, 1]} : vector<16x66xf32> to vector<16x1xf32>
    %12 = vector.extract_strided_slice %9 {offsets = [0, 65], sizes = [16, 1], strides = [1, 1]} : vector<16x66xf32> to vector<16x1xf32>
    %13 = tpu.transpose %12, [1, 0] : vector<16x1xf32> -> vector<1x16xf32>
    %14 = vector.broadcast %11 : vector<16x1xf32> to vector<16x16xf32>
    %15 = vector.broadcast %13 : vector<1x16xf32> to vector<16x16xf32>
    %16 = arith.addf %14, %15 : vector<16x16xf32>
    %cst_11 = arith.constant 2.000000e-01 : f32
    %17 = vector.broadcast %cst_11 : f32 to vector<16x16xf32>
    %18 = arith.mulf %17, %16 : vector<16x16xf32>
    %19 = arith.maximumf %16, %18 : vector<16x16xf32>
    %cst_12 = arith.constant -1.000000e+30 : f32
    %20 = vector.broadcast %cst_12 : f32 to vector<16x16xf32>
    %21 = arith.select %4, %19, %20 : vector<16x16xi1>, vector<16x16xf32>
    %cst_13 = arith.constant dense<0xFF800000> : vector<16xf32>
    %22 = vector.multi_reduction <maximumf>, %21, %cst_13 [1] : vector<16x16xf32> to vector<16xf32>
    %23 = vector.shape_cast %22 : vector<16xf32> to vector<16x1xf32>
    %24 = vector.broadcast %23 : vector<16x1xf32> to vector<16x16xf32>
    %25 = arith.subf %21, %24 : vector<16x16xf32>
    %26 = math.exp %25 : vector<16x16xf32>
    %27 = arith.mulf %2, %26 : vector<16x16xf32>
    %cst_14 = arith.constant dense<0.000000e+00> : vector<16xf32>
    %28 = vector.multi_reduction <add>, %27, %cst_14 [1] : vector<16x16xf32> to vector<16xf32>
    %29 = vector.shape_cast %28 : vector<16xf32> to vector<16x1xf32>
    %cst_15 = arith.constant dense<0.000000e+00> : vector<16x64xf32>
    %30 = tpu.matmul %27, %10, %cst_15 {dimension_numbers = #tpu.dot_dimension_numbers<[1], [0], [0], [1], [0, 0, 1, 1], [], []>} : vector<16x16xf32>, vector<16x64xf32>, vector<16x64xf32> -> vector<16x64xf32>
    %31 = tpu.reciprocal %29 {approx = true} : vector<16x1xf32> -> vector<16x1xf32>
    %32 = arith.mulf %29, %31 : vector<16x1xf32>
    %cst_16 = arith.constant 2.000000e+00 : f32
    %33 = vector.broadcast %cst_16 : f32 to vector<16x1xf32>
    %34 = arith.subf %33, %32 : vector<16x1xf32>
    %35 = arith.mulf %31, %34 : vector<16x1xf32>
    %36 = vector.broadcast %35 : vector<16x1xf32> to vector<16x64xf32>
    %37 = arith.mulf %30, %36 : vector<16x64xf32>
    %38 = vector.extract_strided_slice %6 {offsets = [0, 0], sizes = [1, 64], strides = [1, 1]} : vector<3x64xf32> to vector<1x64xf32>
    %39 = vector.broadcast %38 : vector<1x64xf32> to vector<16x64xf32>
    %40 = arith.addf %37, %39 : vector<16x64xf32>
    %cst_17 = arith.constant 0.000000e+00 : f32
    %41 = vector.broadcast %cst_17 : f32 to vector<16x64xf32>
    %42 = arith.maximumf %40, %41 : vector<16x64xf32>
    %c0_18 = arith.constant 0 : index
    %c0_19 = arith.constant 0 : index
    %c0_20 = arith.constant 0 : index
    %43 = vector.load %arg3[%c0_18, %c0_19, %c0_20] : memref<1x64x66xf32, #tpu.memory_space<vmem>>, vector<1x64x66xf32>
    %44 = vector.shape_cast %43 : vector<1x64x66xf32> to vector<64x66xf32>
    %cst_21 = arith.constant dense<0.000000e+00> : vector<16x66xf32>
    %45 = tpu.matmul %42, %44, %cst_21 {dimension_numbers = #tpu.dot_dimension_numbers<[1], [0], [0], [1], [0, 0, 1, 1], [], []>} : vector<16x64xf32>, vector<64x66xf32>, vector<16x66xf32> -> vector<16x66xf32>
    %46 = vector.extract_strided_slice %45 {offsets = [0, 0], sizes = [16, 64], strides = [1, 1]} : vector<16x66xf32> to vector<16x64xf32>
    %47 = vector.extract_strided_slice %45 {offsets = [0, 64], sizes = [16, 1], strides = [1, 1]} : vector<16x66xf32> to vector<16x1xf32>
    %48 = vector.extract_strided_slice %45 {offsets = [0, 65], sizes = [16, 1], strides = [1, 1]} : vector<16x66xf32> to vector<16x1xf32>
    %49 = tpu.transpose %48, [1, 0] : vector<16x1xf32> -> vector<1x16xf32>
    %50 = vector.broadcast %47 : vector<16x1xf32> to vector<16x16xf32>
    %51 = vector.broadcast %49 : vector<1x16xf32> to vector<16x16xf32>
    %52 = arith.addf %50, %51 : vector<16x16xf32>
    %cst_22 = arith.constant 2.000000e-01 : f32
    %53 = vector.broadcast %cst_22 : f32 to vector<16x16xf32>
    %54 = arith.mulf %53, %52 : vector<16x16xf32>
    %55 = arith.maximumf %52, %54 : vector<16x16xf32>
    %cst_23 = arith.constant -1.000000e+30 : f32
    %56 = vector.broadcast %cst_23 : f32 to vector<16x16xf32>
    %57 = arith.select %4, %55, %56 : vector<16x16xi1>, vector<16x16xf32>
    %cst_24 = arith.constant dense<0xFF800000> : vector<16xf32>
    %58 = vector.multi_reduction <maximumf>, %57, %cst_24 [1] : vector<16x16xf32> to vector<16xf32>
    %59 = vector.shape_cast %58 : vector<16xf32> to vector<16x1xf32>
    %60 = vector.broadcast %59 : vector<16x1xf32> to vector<16x16xf32>
    %61 = arith.subf %57, %60 : vector<16x16xf32>
    %62 = math.exp %61 : vector<16x16xf32>
    %63 = arith.mulf %2, %62 : vector<16x16xf32>
    %cst_25 = arith.constant dense<0.000000e+00> : vector<16xf32>
    %64 = vector.multi_reduction <add>, %63, %cst_25 [1] : vector<16x16xf32> to vector<16xf32>
    %65 = vector.shape_cast %64 : vector<16xf32> to vector<16x1xf32>
    %cst_26 = arith.constant dense<0.000000e+00> : vector<16x64xf32>
    %66 = tpu.matmul %63, %46, %cst_26 {dimension_numbers = #tpu.dot_dimension_numbers<[1], [0], [0], [1], [0, 0, 1, 1], [], []>} : vector<16x16xf32>, vector<16x64xf32>, vector<16x64xf32> -> vector<16x64xf32>
    %67 = tpu.reciprocal %65 {approx = true} : vector<16x1xf32> -> vector<16x1xf32>
    %68 = arith.mulf %65, %67 : vector<16x1xf32>
    %cst_27 = arith.constant 2.000000e+00 : f32
    %69 = vector.broadcast %cst_27 : f32 to vector<16x1xf32>
    %70 = arith.subf %69, %68 : vector<16x1xf32>
    %71 = arith.mulf %67, %70 : vector<16x1xf32>
    %72 = vector.broadcast %71 : vector<16x1xf32> to vector<16x64xf32>
    %73 = arith.mulf %66, %72 : vector<16x64xf32>
    %74 = vector.extract_strided_slice %6 {offsets = [1, 0], sizes = [1, 64], strides = [1, 1]} : vector<3x64xf32> to vector<1x64xf32>
    %75 = vector.broadcast %74 : vector<1x64xf32> to vector<16x64xf32>
    %76 = arith.addf %73, %75 : vector<16x64xf32>
    %cst_28 = arith.constant 0.000000e+00 : f32
    %77 = vector.broadcast %cst_28 : f32 to vector<16x64xf32>
    %78 = arith.maximumf %76, %77 : vector<16x64xf32>
    %c0_29 = arith.constant 0 : index
    %c0_30 = arith.constant 0 : index
    %c0_31 = arith.constant 0 : index
    %79 = vector.load %arg4[%c0_29, %c0_30, %c0_31] : memref<1x64x66xf32, #tpu.memory_space<vmem>>, vector<1x64x66xf32>
    %80 = vector.shape_cast %79 : vector<1x64x66xf32> to vector<64x66xf32>
    %cst_32 = arith.constant dense<0.000000e+00> : vector<16x66xf32>
    %81 = tpu.matmul %78, %80, %cst_32 {dimension_numbers = #tpu.dot_dimension_numbers<[1], [0], [0], [1], [0, 0, 1, 1], [], []>} : vector<16x64xf32>, vector<64x66xf32>, vector<16x66xf32> -> vector<16x66xf32>
    %82 = vector.extract_strided_slice %81 {offsets = [0, 0], sizes = [16, 64], strides = [1, 1]} : vector<16x66xf32> to vector<16x64xf32>
    %83 = vector.extract_strided_slice %81 {offsets = [0, 64], sizes = [16, 1], strides = [1, 1]} : vector<16x66xf32> to vector<16x1xf32>
    %84 = vector.extract_strided_slice %81 {offsets = [0, 65], sizes = [16, 1], strides = [1, 1]} : vector<16x66xf32> to vector<16x1xf32>
    %85 = tpu.transpose %84, [1, 0] : vector<16x1xf32> -> vector<1x16xf32>
    %86 = vector.broadcast %83 : vector<16x1xf32> to vector<16x16xf32>
    %87 = vector.broadcast %85 : vector<1x16xf32> to vector<16x16xf32>
    %88 = arith.addf %86, %87 : vector<16x16xf32>
    %cst_33 = arith.constant 2.000000e-01 : f32
    %89 = vector.broadcast %cst_33 : f32 to vector<16x16xf32>
    %90 = arith.mulf %89, %88 : vector<16x16xf32>
    %91 = arith.maximumf %88, %90 : vector<16x16xf32>
    %cst_34 = arith.constant -1.000000e+30 : f32
    %92 = vector.broadcast %cst_34 : f32 to vector<16x16xf32>
    %93 = arith.select %4, %91, %92 : vector<16x16xi1>, vector<16x16xf32>
    %cst_35 = arith.constant dense<0xFF800000> : vector<16xf32>
    %94 = vector.multi_reduction <maximumf>, %93, %cst_35 [1] : vector<16x16xf32> to vector<16xf32>
    %95 = vector.shape_cast %94 : vector<16xf32> to vector<16x1xf32>
    %96 = vector.broadcast %95 : vector<16x1xf32> to vector<16x16xf32>
    %97 = arith.subf %93, %96 : vector<16x16xf32>
    %98 = math.exp %97 : vector<16x16xf32>
    %99 = arith.mulf %2, %98 : vector<16x16xf32>
    %cst_36 = arith.constant dense<0.000000e+00> : vector<16xf32>
    %100 = vector.multi_reduction <add>, %99, %cst_36 [1] : vector<16x16xf32> to vector<16xf32>
    %101 = vector.shape_cast %100 : vector<16xf32> to vector<16x1xf32>
    %cst_37 = arith.constant dense<0.000000e+00> : vector<16x64xf32>
    %102 = tpu.matmul %99, %82, %cst_37 {dimension_numbers = #tpu.dot_dimension_numbers<[1], [0], [0], [1], [0, 0, 1, 1], [], []>} : vector<16x16xf32>, vector<16x64xf32>, vector<16x64xf32> -> vector<16x64xf32>
    %103 = tpu.reciprocal %101 {approx = true} : vector<16x1xf32> -> vector<16x1xf32>
    %104 = arith.mulf %101, %103 : vector<16x1xf32>
    %cst_38 = arith.constant 2.000000e+00 : f32
    %105 = vector.broadcast %cst_38 : f32 to vector<16x1xf32>
    %106 = arith.subf %105, %104 : vector<16x1xf32>
    %107 = arith.mulf %103, %106 : vector<16x1xf32>
    %108 = vector.broadcast %107 : vector<16x1xf32> to vector<16x64xf32>
    %109 = arith.mulf %102, %108 : vector<16x64xf32>
    %110 = vector.extract_strided_slice %6 {offsets = [2, 0], sizes = [1, 64], strides = [1, 1]} : vector<3x64xf32> to vector<1x64xf32>
    %111 = vector.broadcast %110 : vector<1x64xf32> to vector<16x64xf32>
    %112 = arith.addf %109, %111 : vector<16x64xf32>
    %c0_39 = arith.constant 0 : index
    %c0_40 = arith.constant 0 : index
    %c0_41 = arith.constant 0 : index
    %113 = vector.load %arg7[%c0_39, %c0_40, %c0_41] : memref<1x16x64xf32, #tpu.memory_space<vmem>>, vector<1x16x64xf32>
    %114 = vector.shape_cast %113 : vector<1x16x64xf32> to vector<16x64xf32>
    %115 = vector.shape_cast %112 : vector<16x64xf32> to vector<1x16x64xf32>
    tpu.vector_store %arg7[%c0_39, %c0_40, %c0_41], %115 {strides = array<i32>} : memref<1x16x64xf32, #tpu.memory_space<vmem>>, vector<1x16x64xf32>,
    return
  }
  func.func @transform_0(%arg0: i32) -> (i32, i32) {
    %c0_i32 = arith.constant 0 : i32
    %c0_i32_0 = arith.constant 0 : i32
    %c0_i32_1 = arith.constant 0 : i32
    return %c0_i32, %c0_i32_0 : i32, i32
  }
  func.func @transform_1(%arg0: i32) -> (i32, i32, i32) {
    %c0_i32 = arith.constant 0 : i32
    %c0_i32_0 = arith.constant 0 : i32
    %c0_i32_1 = arith.constant 0 : i32
    return %arg0, %c0_i32, %c0_i32_0 : i32, i32, i32
  }
  func.func @transform_2(%arg0: i32) -> (i32, i32, i32) {
    %c0_i32 = arith.constant 0 : i32
    %c0_i32_0 = arith.constant 0 : i32
    %c0_i32_1 = arith.constant 0 : i32
    return %arg0, %c0_i32, %c0_i32_0 : i32, i32, i32
  }
  func.func @transform_3(%arg0: i32) -> (i32, i32, i32) {
    %c0_i32 = arith.constant 0 : i32
    %c0_i32_0 = arith.constant 0 : i32
    %c0_i32_1 = arith.constant 0 : i32
    return %arg0, %c0_i32, %c0_i32_0 : i32, i32, i32
  }
  func.func @transform_4(%arg0: i32) -> (i32, i32, i32) {
    %c0_i32 = arith.constant 0 : i32
    %c0_i32_0 = arith.constant 0 : i32
    %c0_i32_1 = arith.constant 0 : i32
    return %arg0, %c0_i32, %c0_i32_0 : i32, i32, i32
  }
  func.func @transform_5(%arg0: i32) -> (i32, i32, i32) {
    %c0_i32 = arith.constant 0 : i32
    %c0_i32_0 = arith.constant 0 : i32
    %c0_i32_1 = arith.constant 0 : i32
    return %arg0, %c0_i32, %c0_i32_0 : i32, i32, i32
  }
  func.func @transform_6(%arg0: i32) -> (i32, i32, i32) {
    %c0_i32 = arith.constant 0 : i32
    %c0_i32_0 = arith.constant 0 : i32
    %c0_i32_1 = arith.constant 0 : i32
    return %arg0, %c0_i32, %c0_i32_0 : i32, i32, i32
  }
}

</mosaic_0001>

<llo_original>
// kernel: tpu_custom_call.1
$region0: #{tpu_custom_call.1}
  #allocation0 [shape = 'u32[]', space=smem, size = 0x4, offset = 0x4, fixed_abs, tag = 'smem constant byte address 0x4 - core index']
  #allocation1 [shape = 'u32[144,128]{1,0:T(1,128)}', space=vmem, size = 0x12000, scoped, tag = 'internal scratch']
  %s0 = inlined_call_operand.vmem [shape: f32[16,8], index: 0, kind: input, shape index: {}]
  %s1 = inlined_call_operand.vmem [shape: f32[3,8,66], index: 1, kind: input, shape index: {}]
  %s2 = inlined_call_operand.hbm [shape: f32[3,64,66], index: 2, kind: input, shape index: {}]
  %s3 = inlined_call_operand.hbm [shape: f32[3,64,66], index: 3, kind: input, shape index: {}]
  %s4 = inlined_call_operand.vmem [shape: f32[3,3,64], index: 4, kind: input, shape index: {}]
  %s5 = inlined_call_operand.hbm [shape: f32[3,16,16], index: 5, kind: input, shape index: {}]
  %s6 = inlined_call_operand.hbm [shape: f32[3,16,64], index: 6, kind: output, shape index: {}]
  %s7 = sld [smem:[#allocation0]]
  $region69: #{tpu_custom_call.1} parent=0
    _
  %s9 = ssub.s32 1, %s7
  %s10 = scalar_select 0, %s9, %s7
  $region1: #{tpu_custom_call.1} parent=0
    #allocation2 [shape = 'u8[65536]{0}', space=vmem, size = 0x10000, scoped, tag = 'input window, operand 2']
    #allocation3 [shape = 's32[2]{0}', space=sflag, size = 0x8, scoped, tag = 'scoped memory for tpu_custom_call.1']
    #allocation4 [shape = 's32[2]{0}', space=sflag, size = 0x8, scoped, tag = 'scoped memory for tpu_custom_call.1']
    #allocation5 [shape = 'u8[65536]{0}', space=vmem, size = 0x10000, scoped, tag = 'input window, operand 3']
    #allocation6 [shape = 's32[2]{0}', space=sflag, size = 0x8, scoped, tag = 'scoped memory for tpu_custom_call.1']
    #allocation7 [shape = 'u8[16384]{0}', space=vmem, size = 0x4000, scoped, tag = 'input window, operand 5']
    #allocation8 [shape = 'u8[16384]{0}', space=vmem, size = 0x4000, scoped, tag = 'output window, operand 0']
    %11 = vsyncpa [#allocation3], 0
    %s12 = scalar_lea.sflag [#allocation3], 1
    %13 = vsyncpa %s12, 0
    %14 = vsyncpa [#allocation6], 0
    %s15 = scalar_lea.sflag [#allocation6], 1
    %16 = vsyncpa %s15, 0
    %17 = vsyncpa [#allocation4], 0
    %s18 = scalar_lea.sflag [#allocation4], 1
    %19 = vsyncpa %s18, 0
    loop: start=0, step=1, limit=5
    $region2: #{tpu_custom_call.1} parent=1 // loop_pre_header
      _
    $region3: #{tpu_custom_call.1} parent=1 // loop_header
      %s21 = sphi 0, %s25
      %p22 = scmp.ge.s32.totalorder %s21, 5
      %s29 = sphi 0, %s29
      %s31 = sphi 0, %s29
      %s32 = sphi 0, %s31
      %s46 = sphi 0, %s32
      %s52 = sphi 0, %s54
      %s55 = sphi 0, %s52
      %s56 = sphi 0, %s55
      %s72 = sphi 0, %s56
      %s78 = sphi 0, %s80
      %s81 = sphi 0, %s78
      %s82 = sphi 0, %s81
      %s98 = sphi 0, %s82
      %s104 = sphi 0, %s106
      %s107 = sphi 0, %s104
      %s108 = sphi 0, %s107
      %s124 = sphi 0, %s108
      %s130 = sphi 0, %s132
      %s133 = sphi 0, %s130
      %s134 = sphi 0, %s133
      %s150 = sphi 0, %s134
      %s156 = sphi 0, %s158
      %s159 = sphi 0, %s156
      %s160 = sphi 0, %s159
      %s176 = sphi 0, %s160
      %s182 = sphi 0, %s184
      %s185 = sphi 0, %s182
      %s186 = sphi 0, %s185
      %s202 = sphi 0, %s186
    $region4: #{tpu_custom_call.1} parent=1 // loop_header_branch
      %24 = sbr.rel (%p22) target = $region8
    $region5: #{tpu_custom_call.1} parent=1 // loop_body
      %s26 = ssub.s32 %s21, 1
      %s27 = ssub.s32 %s21, 2
      %s28 = sadd.s32 %s21, 1
      %s30 = sadd.s32 %s29, 1
      %p33 = scmp.eq.s32.totalorder %s21, 2
      %p34 = scmp.ne.s32.totalorder %s29, %s31
      %p35 = scmp.eq.s32.totalorder %s21, 0
      %p36 = por %p34, %p35
      %p37 = scmp.ne.s32.totalorder %s29, %s31
      %p38 = scmp.eq.s32.totalorder %s26, 2
      %p39 = por %p37, %p38
      %p40 = scmp.ne.s32.totalorder %s31, %s32
      %p41 = scmp.eq.s32.totalorder %s26, 0
      %p42 = por %p40, %p41
      %p43 = scmp.ne.s32.totalorder %s31, %s32
      %p44 = scmp.eq.s32.totalorder %s27, 2
      %p45 = por %p43, %p44
      %p47 = scmp.ne.s32.totalorder %s32, %s46
      %p48 = scmp.eq.s32.totalorder %s27, 0
      %p49 = por %p47, %p48
      %s50 = ssub.s32 %s21, %s28
      %p51 = scmp.eq.s32.totalorder %s50, 0
      %s53 = sadd.s32 %s52, 1
      %s54 = scalar_select %p51, %s52, %s53
      %p57 = pneg %p51
      %p58 = scmp.eq.s32.totalorder %s21, 2
      %p59 = por %p57, %p58
      %p60 = scmp.ne.s32.totalorder %s52, %s55
      %p61 = scmp.eq.s32.totalorder %s21, 0
      %p62 = por %p60, %p61
      %p63 = scmp.ne.s32.totalorder %s52, %s55
      %p64 = scmp.eq.s32.totalorder %s26, 2
      %p65 = por %p63, %p64
      %p66 = scmp.ne.s32.totalorder %s55, %s56
      %p67 = scmp.eq.s32.totalorder %s26, 0
      %p68 = por %p66, %p67
      %p69 = scmp.ne.s32.totalorder %s55, %s56
      %p70 = scmp.eq.s32.totalorder %s27, 2
      %p71 = por %p69, %p70
      %p73 = scmp.ne.s32.totalorder %s56, %s72
      %p74 = scmp.eq.s32.totalorder %s27, 0
      %p75 = por %p73, %p74
      %s76 = ssub.s32 %s21, %s28
      %p77 = scmp.eq.s32.totalorder %s76, 0
      %s79 = sadd.s32 %s78, 1
      %s80 = scalar_select %p77, %s78, %s79
      %p83 = pneg %p77
      %p84 = scmp.eq.s32.totalorder %s21, 2
      %p85 = por %p83, %p84
      %p86 = scmp.ne.s32.totalorder %s78, %s81
      %p87 = scmp.eq.s32.totalorder %s21, 0
      %p88 = por %p86, %p87
      %p89 = scmp.ne.s32.totalorder %s78, %s81
      %p90 = scmp.eq.s32.totalorder %s26, 2
      %p91 = por %p89, %p90
      %p92 = scmp.ne.s32.totalorder %s81, %s82
      %p93 = scmp.eq.s32.totalorder %s26, 0
      %p94 = por %p92, %p93
      %p95 = scmp.ne.s32.totalorder %s81, %s82
      %p96 = scmp.eq.s32.totalorder %s27, 2
      %p97 = por %p95, %p96
      %p99 = scmp.ne.s32.totalorder %s82, %s98
      %p100 = scmp.eq.s32.totalorder %s27, 0
      %p101 = por %p99, %p100
      %s102 = ssub.s32 %s21, %s28
      %p103 = scmp.eq.s32.totalorder %s102, 0
      %s105 = sadd.s32 %s104, 1
      %s106 = scalar_select %p103, %s104, %s105
      %p109 = pneg %p103
      %p110 = scmp.eq.s32.totalorder %s21, 2
      %p111 = por %p109, %p110
      %p112 = scmp.ne.s32.totalorder %s104, %s107
      %p113 = scmp.eq.s32.totalorder %s21, 0
      %p114 = por %p112, %p113
      %p115 = scmp.ne.s32.totalorder %s104, %s107
      %p116 = scmp.eq.s32.totalorder %s26, 2
      %p117 = por %p115, %p116
      %p118 = scmp.ne.s32.totalorder %s107, %s108
      %p119 = scmp.eq.s32.totalorder %s26, 0
      %p120 = por %p118, %p119
      %p121 = scmp.ne.s32.totalorder %s107, %s108
      %p122 = scmp.eq.s32.totalorder %s27, 2
      %p123 = por %p121, %p122
      %p125 = scmp.ne.s32.totalorder %s108, %s124
      %p126 = scmp.eq.s32.totalorder %s27, 0
      %p127 = por %p125, %p126
      %s128 = ssub.s32 %s21, %s28
      %p129 = scmp.eq.s32.totalorder %s128, 0
      %s131 = sadd.s32 %s130, 1
      %s132 = scalar_select %p129, %s130, %s131
      %p135 = pneg %p129
      %p136 = scmp.eq.s32.totalorder %s21, 2
      %p137 = por %p135, %p136
      %p138 = scmp.ne.s32.totalorder %s130, %s133
      %p139 = scmp.eq.s32.totalorder %s21, 0
      %p140 = por %p138, %p139
      %p141 = scmp.ne.s32.totalorder %s130, %s133
      %p142 = scmp.eq.s32.totalorder %s26, 2
      %p143 = por %p141, %p142
      %p144 = scmp.ne.s32.totalorder %s133, %s134
      %p145 = scmp.eq.s32.totalorder %s26, 0
      %p146 = por %p144, %p145
      %p147 = scmp.ne.s32.totalorder %s133, %s134
      %p148 = scmp.eq.s32.totalorder %s27, 2
      %p149 = por %p147, %p148
      %p151 = scmp.ne.s32.totalorder %s134, %s150
      %p152 = scmp.eq.s32.totalorder %s27, 0
      %p153 = por %p151, %p152
      %s154 = ssub.s32 %s21, %s28
      %p155 = scmp.eq.s32.totalorder %s154, 0
      %s157 = sadd.s32 %s156, 1
      %s158 = scalar_select %p155, %s156, %s157
      %p161 = pneg %p155
      %p162 = scmp.eq.s32.totalorder %s21, 2
      %p163 = por %p161, %p162
      %p164 = scmp.ne.s32.totalorder %s156, %s159
      %p165 = scmp.eq.s32.totalorder %s21, 0
      %p166 = por %p164, %p165
      %p167 = scmp.ne.s32.totalorder %s156, %s159
      %p168 = scmp.eq.s32.totalorder %s26, 2
      %p169 = por %p167, %p168
      %p170 = scmp.ne.s32.totalorder %s159, %s160
      %p171 = scmp.eq.s32.totalorder %s26, 0
      %p172 = por %p170, %p171
      %p173 = scmp.ne.s32.totalorder %s159, %s160
      %p174 = scmp.eq.s32.totalorder %s27, 2
      %p175 = por %p173, %p174
      %p177 = scmp.ne.s32.totalorder %s160, %s176
      %p178 = scmp.eq.s32.totalorder %s27, 0
      %p179 = por %p177, %p178
      %s180 = ssub.s32 %s21, %s28
      %p181 = scmp.eq.s32.totalorder %s180, 0
      %s183 = sadd.s32 %s182, 1
      %s184 = scalar_select %p181, %s182, %s183
      %p187 = pneg %p181
      %p188 = scmp.eq.s32.totalorder %s21, 2
      %p189 = por %p187, %p188
      %p190 = scmp.ne.s32.totalorder %s182, %s185
      %p191 = scmp.eq.s32.totalorder %s21, 0
      %p192 = por %p190, %p191
      %p193 = scmp.ne.s32.totalorder %s182, %s185
      %p194 = scmp.eq.s32.totalorder %s26, 2
      %p195 = por %p193, %p194
      %p196 = scmp.ne.s32.totalorder %s185, %s186
      %p197 = scmp.eq.s32.totalorder %s26, 0
      %p198 = por %p196, %p197
      %p199 = scmp.ne.s32.totalorder %s185, %s186
      %p200 = scmp.eq.s32.totalorder %s27, 2
      %p201 = por %p199, %p200
      %p203 = scmp.ne.s32.totalorder %s186, %s202
      %p204 = scmp.eq.s32.totalorder %s27, 0
      %p205 = por %p203, %p204
      %p206 = scmp.le.s32.totalorder 1, %s21
      %p207 = scmp.lt.s32.totalorder %s21, 4
      %p208 = pnand %p206, %p207
      %p209 = pneg %p208
      // Predicated region
      $region9: #{tpu_custom_call.1} parent=5 // pred_check
        _
      $region10: #{tpu_custom_call.1} parent=5 // pred_check_branch
        %211 = sbr.rel (%p208) target = $region12
      $region11: #{tpu_custom_call.1} parent=5 // pred_region
        %s212 = ssub.s32 %s21, 1
        // Predicated region
        $region13: #{tpu_custom_call.1} parent=11 // pred_check
          %p213 = pneg %p42
        $region14: #{tpu_custom_call.1} parent=11 // pred_check_branch
          %215 = sbr.rel (%p213) target = $region16
        $region15: #{tpu_custom_call.1} parent=11 // pred_region
          _
        $region16: #{tpu_custom_call.1} parent=11 // pred_fallthru
          _
      $region12: #{tpu_custom_call.1} parent=5 // pred_fallthru
        _
      %p216 = scmp.lt.s32.totalorder %s21, 3
      // Predicated region
      $region17: #{tpu_custom_call.1} parent=5 // pred_check
        %p217 = pneg %p216
      $region18: #{tpu_custom_call.1} parent=5 // pred_check_branch
        %219 = sbr.rel (%p217) target = $region20
      $region19: #{tpu_custom_call.1} parent=5 // pred_region
        // Predicated region
        $region21: #{tpu_custom_call.1} parent=19 // pred_check
          %p220 = pneg %p62
        $region22: #{tpu_custom_call.1} parent=19 // pred_check_branch
          %222 = sbr.rel (%p220) target = $region24
        $region23: #{tpu_custom_call.1} parent=19 // pred_region
          %p223 = scmp.lt.s32.totalorder %s21, 2
          %s224 = scalar_select %p223, %s21, 2
          %s225 = smul.addr %s224, 8
          %s226 = scalar_lea.vmem %s1, %s225
        $region24: #{tpu_custom_call.1} parent=19 // pred_fallthru
          _
        // Predicated region
        $region25: #{tpu_custom_call.1} parent=19 // pred_check
          %p227 = pneg %p88
        $region26: #{tpu_custom_call.1} parent=19 // pred_check_branch
          %229 = sbr.rel (%p227) target = $region28
        $region27: #{tpu_custom_call.1} parent=19 // pred_region
          %s230 = sand.u32 %s78, 1
          %s231 = scalar_lea.sflag [#allocation3], %s230
          %s232 = sand.u32 %s78, 1
          %s233 = smul.addr %s232, 64
          %s234 = scalar_lea.vmem [#allocation2], %s233
          %s236 = ssub.s32 1024, 1024
          %237 = vsyncadd %s231, %s236
          %s238 = smul.addr %s21, 8
          %s239 = smul.addr %s238, 128
          %s240 = scalar_lea.hbm %s2, %s239
          %s241 = sshll.u32 %s234, 4
          %s242 = int_to_ptr.vmem [resolvable:$true] %s241
          %247 = dma.hbm_to_vmem [thread:$0]  %s240, 1024, %s242, %s231, 128, 128, 8
        $region28: #{tpu_custom_call.1} parent=19 // pred_fallthru
          _
        // Predicated region
        $region29: #{tpu_custom_call.1} parent=19 // pred_check
          %p248 = pneg %p114
        $region30: #{tpu_custom_call.1} parent=19 // pred_check_branch
          %250 = sbr.rel (%p248) target = $region32
        $region31: #{tpu_custom_call.1} parent=19 // pred_region
          %s251 = sand.u32 %s21, 1
          %s252 = scalar_lea.sflag [#allocation6], %s251
          %s253 = sand.u32 %s104, 1
          %s254 = smul.addr %s253, 64
          %s255 = scalar_lea.vmem [#allocation5], %s254
          %s257 = ssub.s32 1024, 1024
          %258 = vsyncadd %s252, %s257
          %s259 = smul.addr %s21, 8
          %s260 = smul.addr %s259, 128
          %s261 = scalar_lea.hbm %s3, %s260
          %s262 = sshll.u32 %s255, 4
          %s263 = int_to_ptr.vmem [resolvable:$true] %s262
          %268 = dma.hbm_to_vmem [thread:$0]  %s261, 1024, %s263, %s252, 128, 128, 8
        $region32: #{tpu_custom_call.1} parent=19 // pred_fallthru
          _
        // Predicated region
        $region33: #{tpu_custom_call.1} parent=19 // pred_check
          %p269 = pneg %p140
        $region34: #{tpu_custom_call.1} parent=19 // pred_check_branch
          %271 = sbr.rel (%p269) target = $region36
        $region35: #{tpu_custom_call.1} parent=19 // pred_region
          %p272 = scmp.lt.s32.totalorder %s21, 2
          %s273 = scalar_select %p272, %s21, 2
          %s274 = smul.addr %s273, 4
          %s275 = scalar_lea.vmem %s4, %s274
        $region36: #{tpu_custom_call.1} parent=19 // pred_fallthru
          _
        // Predicated region
        $region37: #{tpu_custom_call.1} parent=19 // pred_check
          %p276 = pneg %p166
        $region38: #{tpu_custom_call.1} parent=19 // pred_check_branch
          %278 = sbr.rel (%p276) target = $region40
        $region39: #{tpu_custom_call.1} parent=19 // pred_region
          %s279 = sand.u32 %s21, 1
          %s280 = scalar_lea.sflag [#allocation6], %s279
          %s281 = sand.u32 %s156, 1
          %s282 = smul.addr %s281, 16
          %s283 = scalar_lea.vmem [#allocation7], %s282
          %s285 = ssub.s32 256, 256
          %286 = vsyncadd %s280, %s285
          %s287 = smul.addr %s21, 2
          %s288 = smul.addr %s287, 128
          %s289 = scalar_lea.hbm %s5, %s288
          %s290 = sshll.u32 %s283, 4
          %s291 = int_to_ptr.vmem [resolvable:$true] %s290
          %296 = dma.hbm_to_vmem [thread:$0]  %s289, 256, %s291, %s280, 128, 128, 8
        $region40: #{tpu_custom_call.1} parent=19 // pred_fallthru
          _
      $region20: #{tpu_custom_call.1} parent=5 // pred_fallthru
        _
      %p297 = scmp.le.s32.totalorder 1, %s21
      %p298 = scmp.lt.s32.totalorder %s21, 4
      %p299 = pnand %p297, %p298
      %p300 = pneg %p299
      // Predicated region
      $region41: #{tpu_custom_call.1} parent=5 // pred_check
        _
      $region42: #{tpu_custom_call.1} parent=5 // pred_check_branch
        %302 = sbr.rel (%p299) target = $region44
      $region43: #{tpu_custom_call.1} parent=5 // pred_region
        %s303 = ssub.s32 %s21, 1
        %s304 = sand.u32 %s81, 1
        %s305 = scalar_lea.sflag [#allocation3], %s304
        %s306 = sand.u32 %s81, 1
        %s307 = smul.addr %s306, 64
        %s308 = scalar_lea.vmem [#allocation2], %s307
        // Predicated region
        $region45: #{tpu_custom_call.1} parent=43 // pred_check
          %p309 = pneg %p94
        $region46: #{tpu_custom_call.1} parent=43 // pred_check_branch
          %311 = sbr.rel (%p309) target = $region48
        $region47: #{tpu_custom_call.1} parent=43 // pred_region
          %312 = dma.done %s305, 1024
        $region48: #{tpu_custom_call.1} parent=43 // pred_fallthru
          _
        %s313 = sand.u32 %s26, 1
        %s314 = scalar_lea.sflag [#allocation6], %s313
        %s315 = sand.u32 %s107, 1
        %s316 = smul.addr %s315, 64
        %s317 = scalar_lea.vmem [#allocation5], %s316
        // Predicated region
        $region49: #{tpu_custom_call.1} parent=43 // pred_check
          %p318 = pneg %p120
        $region50: #{tpu_custom_call.1} parent=43 // pred_check_branch
          %320 = sbr.rel (%p318) target = $region52
        $region51: #{tpu_custom_call.1} parent=43 // pred_region
          %321 = dma.done %s314, 1024
        $region52: #{tpu_custom_call.1} parent=43 // pred_fallthru
          _
        %s322 = sand.u32 %s26, 1
        %s323 = scalar_lea.sflag [#allocation6], %s322
        %s324 = sand.u32 %s159, 1
        %s325 = smul.addr %s324, 16
        %s326 = scalar_lea.vmem [#allocation7], %s325
        // Predicated region
        $region53: #{tpu_custom_call.1} parent=43 // pred_check
          %p327 = pneg %p172
        $region54: #{tpu_custom_call.1} parent=43 // pred_check_branch
          %329 = sbr.rel (%p327) target = $region56
        $region55: #{tpu_custom_call.1} parent=43 // pred_region
          %330 = dma.done %s323, 256
        $region56: #{tpu_custom_call.1} parent=43 // pred_fallthru
          _
        %p331 = pneg %p42
        %p332 = pneg %p39
        %p333 = scmp.lt.s32.totalorder %s26, 2
        %s334 = scalar_select %p333, %s26, 2
        %s335 = smul.addr %s334, 8
        %s336 = scalar_lea.vmem %s1, %s335
        %p337 = pneg %p68
        %p338 = pneg %p65
        %s339 = sand.u32 %s81, 1
        %s340 = scalar_lea.sflag [#allocation3], %s339
        %s341 = sand.u32 %s81, 1
        %s342 = smul.addr %s341, 64
        %s343 = scalar_lea.vmem [#allocation2], %s342
        %p344 = pneg %p94
        %p345 = pneg %p91
        %s346 = sand.u32 %s26, 1
        %s347 = scalar_lea.sflag [#allocation6], %s346
        %s348 = sand.u32 %s107, 1
        %s349 = smul.addr %s348, 64
        %s350 = scalar_lea.vmem [#allocation5], %s349
        %p351 = pneg %p120
        %p352 = pneg %p117
        %p353 = scmp.lt.s32.totalorder %s26, 2
        %s354 = scalar_select %p353, %s26, 2
        %s355 = smul.addr %s354, 4
        %s356 = scalar_lea.vmem %s4, %s355
        %p357 = pneg %p146
        %p358 = pneg %p143
        %s359 = sand.u32 %s26, 1
        %s360 = scalar_lea.sflag [#allocation6], %s359
        %s361 = sand.u32 %s159, 1
        %s362 = smul.addr %s361, 16
        %s363 = scalar_lea.vmem [#allocation7], %s362
        %p364 = pneg %p172
        %p365 = pneg %p169
        %p366 = pneg %p198
        %p367 = pneg %p195
        %s368 = sand.u32 %s185, 1
        %s369 = scalar_lea.sflag [#allocation4], %s368
        %s370 = sand.u32 %s185, 1
        %s371 = smul.addr %s370, 16
        %s372 = scalar_lea.vmem [#allocation8], %s371
        %p373 = scmp.lt.s32.totalorder %s26, 2
        %s374 = scalar_select %p373, %s26, 2
        %s375 = smul.addr %s374, 8
        %s376 = scalar_lea.vmem %s1, %s375
        %p377 = scmp.lt.s32.totalorder %s26, 2
        %s378 = scalar_select %p377, %s26, 2
        %s379 = smul.addr %s378, 4
        %s380 = scalar_lea.vmem %s4, %s379
        %v381 = vld [vmem:[%s0] sm:$0xff]
        %v382 = vld [vmem:[%s0 + $0x8] sm:$0xff]
        %v383 = vld [vmem:[%s326] sm:$0xff]
        %v384 = vld [vmem:[%s326 + $0x8] sm:$0xff]
        %vm385 = vcmp.gt.f32.partialorder %v383, 0.0
        %vm386 = vcmp.gt.f32.partialorder %v384, 0.0
        %v387 = vld [vmem:[%s380] sm:$0x7]
        %v388 = vld [vmem:[%s376] sm:$0xff]
        %vm389 = vcmask 64512
        %v391 = vsel %vm389, %v381, 0
        %v394 = vsel %vm389, %v382, 0
        %396 = vmatprep.subr.mxu0 0.0
        %397 = vmatpush1.msra.mxu0 %v388
        %398 = vmatprep.subr.mxu0 0.0
        %399 = vmatpush1.msra.mxu0 0.0
        %400 = vmatprep.subr.mxu0 0.0
        %401 = vmatpush1.msra.mxu0 0.0
        %402 = vmatprep.subr.mxu0 0.0
        %403 = vmatpush1.msra.mxu0 0.0
        %404 = vmatprep.subr.mxu0 0.0
        %405 = vmatpush1.msra.mxu0 0.0
        %406 = vmatprep.subr.mxu0 0.0
        %407 = vmatpush1.msra.mxu0 0.0
        %408 = vmatprep.subr.mxu0 0.0
        %409 = vmatpush1.msra.mxu0 0.0
        %410 = vmatprep.subr.mxu0 0.0
        %411 = vmatpush1.msra.mxu0 0.0
        %412 = vmatprep.subr.mxu0 0.0
        %413 = vmatpush1.msra.mxu0 0.0
        %414 = vmatprep.subr.mxu0 0.0
        %415 = vmatpush1.msra.mxu0 0.0
        %416 = vmatprep.subr.mxu0 0.0
        %417 = vmatpush1.msra.mxu0 0.0
        %418 = vmatprep.subr.mxu0 0.0
        %419 = vmatpush1.msra.mxu0 0.0
        %420 = vmatprep.subr.mxu0 0.0
        %421 = vmatpush1.msra.mxu0 0.0
        %422 = vmatprep.subr.mxu0 0.0
        %423 = vmatpush1.msra.mxu0 0.0
        %424 = vmatprep.subr.mxu0 0.0
        %425 = vmatpush1.msra.mxu0 0.0
        %426 = vmatprep.subr.mxu0 0.0
        %427 = vmatpush1.msra.mxu0 0.0
        %428 = vmatprep.subr.mxu0 0.0
        %429 = vmatpush1.msra.mxu0 0.0
        %430 = vmatprep.subr.mxu0 0.0
        %431 = vmatpush1.msra.mxu0 0.0
        %432 = vmatprep.subr.mxu0 0.0
        %433 = vmatpush1.msra.mxu0 0.0
        %434 = vmatprep.subr.mxu0 0.0
        %435 = vmatpush1.msra.mxu0 0.0
        %436 = vmatprep.subr.mxu0 0.0
        %437 = vmatpush1.msra.mxu0 0.0
        %438 = vmatprep.subr.mxu0 0.0
        %439 = vmatpush1.msra.mxu0 0.0
        %440 = vmatprep.subr.mxu0 0.0
        %441 = vmatpush1.msra.mxu0 0.0
        %442 = vmatprep.subr.mxu0 0.0
        %443 = vmatpush1.msra.mxu0 0.0
        %444 = vmatprep.subr.mxu0 0.0
        %445 = vmatpush1.msra.mxu0 0.0
        %446 = vmatprep.subr.mxu0 0.0
        %447 = vmatpush1.msra.mxu0 0.0
        %448 = vmatprep.subr.mxu0 0.0
        %449 = vmatpush1.msra.mxu0 0.0
        %450 = vmatprep.subr.mxu0 0.0
        %451 = vmatpush1.msra.mxu0 0.0
        %452 = vmatprep.subr.mxu0 0.0
        %453 = vmatpush1.msra.mxu0 0.0
        %454 = vmatprep.subr.mxu0 0.0
        %455 = vmatpush1.msra.mxu0 0.0
        %456 = vmatprep.subr.mxu0 0.0
        %457 = vmatpush1.msra.mxu0 0.0
        %458 = vmatprep.subr.mxu0 0.0
        %459 = vmatpush1.msra.mxu0 0.0
        %460 = vmatprep.mubr.f32.mxu0 0.0
        %461 = vmatmul.mubr.f32.gmra.mrb[0].mxu0 %v391
        %v462 = vpop.f32.mrb[0].mxu0
        %v463 = vadd.f32 0.0, %v462
        %v464 = vpop.f32.mrb[0].mxu0
        %465 = vmatprep.mubr.f32.mxu0 0.0
        %466 = vmatmul.mubr.f32.gmra.mrb[0].mxu0 %v394
        %v467 = vpop.f32.mrb[0].mxu0
        %v468 = vadd.f32 0.0, %v467
        %v469 = vpop.f32.mrb[0].mxu0
        %470 = vdwg.mxu0
        %473 = vrot.lane.b32.xlu0 %v463, 63
        %v474 = vpop.permute.xlu0 %473
        %475 = vrot.lane.b32.xlu0 %v468, 63
        %v476 = vpop.permute.xlu0 %475
        %479 = vxpose.xlu0.b32.start [1/16] %v474, 128
        %480 = vxpose.xlu0.b32.cont [2/16] %v476, 128
        %481 = vxpose.xlu0.b32.cont [3/16] 0.0, 128
        %482 = vxpose.xlu0.b32.cont [4/16] 0.0, 128
        %483 = vxpose.xlu0.b32.cont [5/16] 0.0, 128
        %484 = vxpose.xlu0.b32.cont [6/16] 0.0, 128
        %485 = vxpose.xlu0.b32.cont [7/16] 0.0, 128
        %486 = vxpose.xlu0.b32.cont [8/16] 0.0, 128
        %487 = vxpose.xlu0.b32.cont [9/16] 0.0, 128
        %488 = vxpose.xlu0.b32.cont [10/16] 0.0, 128
        %489 = vxpose.xlu0.b32.cont [11/16] 0.0, 128
        %490 = vxpose.xlu0.b32.cont [12/16] 0.0, 128
        %491 = vxpose.xlu0.b32.cont [13/16] 0.0, 128
        %492 = vxpose.xlu0.b32.cont [14/16] 0.0, 128
        %493 = vxpose.xlu0.b32.cont [15/16] 0.0, 128
        %494 = vxpose.xlu0.b32.end [16/16] 0.0, 128
        %v495 = vpop.trf.xlu0
        %v496 = vpop.trf.xlu0
        %v497 = vpop.trf.xlu0
        %v498 = vpop.trf.xlu0
        %v499 = vpop.trf.xlu0
        %v500 = vpop.trf.xlu0
        %v501 = vpop.trf.xlu0
        %v502 = vpop.trf.xlu0
        %v503 = vpop.trf.xlu0
        %v504 = vpop.trf.xlu0
        %v505 = vpop.trf.xlu0
        %v506 = vpop.trf.xlu0
        %v507 = vpop.trf.xlu0
        %v508 = vpop.trf.xlu0
        %v509 = vpop.trf.xlu0
        %v510 = vpop.trf.xlu0
        %511 = vset.pattern.permute.xlu0 64
        %512 = vperm.xlu0 %511, %v463
        %v513 = vpop.permute.xlu0 %512
        %515 = vset.pattern.permute.xlu0 64
        %516 = vperm.xlu0 %515, %v468
        %v517 = vpop.permute.xlu0 %516
        %v519 = vlaneseq
        %v520 = vshrl.u32 %v519, 7
        %v521 = vsub.s32 0, %v520
        %v522 = vrot.slane %v495, %v521
        %v523 = vadd.f32 %v513, %v522
        %v524 = vadd.f32 %v517, %v522
        %v525 = vmul.f32 %v523, 0.2
        %v526 = vmul.f32 %v524, 0.2
        %v527 = vmax.f32 %v523, %v525
        %v528 = vmax.f32 %v524, %v526
        %v529 = vsel %vm385, %v527, -1e+30
        %v530 = vsel %vm386, %v528, -1e+30
        %vm531 = vcmask 130048
        %v532 = vsel %vm531, %v529, -inf
        %533 = vmax.xlane.f32.xlu0 %v532
        %v534 = vpop.xlane.xlu0 %533
        %v535 = vsel %vm531, %v530, -inf
        %536 = vmax.xlane.f32.xlu0 %v535
        %v537 = vpop.xlane.xlu0 %536
        %v538 = vsub.f32 %v529, %v534
        %v539 = vsub.f32 %v530, %v537
        %v540 = vmul.f32 %v538, 1.442695
        %v541 = vpow.pop %v540
        %v542 = vmul.f32 %v539, 1.442695
        %v543 = vpow.pop %v542
        %v544 = vmul.f32 %v383, %v541
        %v545 = vmul.f32 %v384, %v543
        %v546 = vsel %vm531, %v544, 0.0
        %547 = vadd.xlane.f32.xlu0 %v546
        %v548 = vpop.xlane.xlu0 %547
        %v549 = vsel %vm531, %v545, 0.0
        %550 = vadd.xlane.f32.xlu0 %v549
        %v551 = vpop.xlane.xlu0 %550
        %v553 = vsel %vm531, %v544, 0
        %v556 = vsel %vm531, %v545, 0
        %558 = vmatprep.subr.mxu0 0.0
        %559 = vmatpush1.msra.mxu0 %v463
        %560 = vmatprep.subr.mxu0 0.0
        %561 = vmatpush1.msra.mxu0 %v468
        %562 = vmatprep.subr.mxu0 0.0
        %563 = vmatpush1.msra.mxu0 0.0
        %564 = vmatprep.subr.mxu0 0.0
        %565 = vmatpush1.msra.mxu0 0.0
        %566 = vmatprep.subr.mxu0 0.0
        %567 = vmatpush1.msra.mxu0 0.0
        %568 = vmatprep.subr.mxu0 0.0
        %569 = vmatpush1.msra.mxu0 0.0
        %570 = vmatprep.subr.mxu0 0.0
        %571 = vmatpush1.msra.mxu0 0.0
        %572 = vmatprep.subr.mxu0 0.0
        %573 = vmatpush1.msra.mxu0 0.0
        %574 = vmatprep.subr.mxu0 0.0
        %575 = vmatpush1.msra.mxu0 0.0
        %576 = vmatprep.subr.mxu0 0.0
        %577 = vmatpush1.msra.mxu0 0.0
        %578 = vmatprep.subr.mxu0 0.0
        %579 = vmatpush1.msra.mxu0 0.0
        %580 = vmatprep.subr.mxu0 0.0
        %581 = vmatpush1.msra.mxu0 0.0
        %582 = vmatprep.subr.mxu0 0.0
        %583 = vmatpush1.msra.mxu0 0.0
        %584 = vmatprep.subr.mxu0 0.0
        %585 = vmatpush1.msra.mxu0 0.0
        %586 = vmatprep.subr.mxu0 0.0
        %587 = vmatpush1.msra.mxu0 0.0
        %588 = vmatprep.subr.mxu0 0.0
        %589 = vmatpush1.msra.mxu0 0.0
        %590 = vmatprep.subr.mxu0 0.0
        %591 = vmatpush1.msra.mxu0 0.0
        %592 = vmatprep.subr.mxu0 0.0
        %593 = vmatpush1.msra.mxu0 0.0
        %594 = vmatprep.subr.mxu0 0.0
        %595 = vmatpush1.msra.mxu0 0.0
        %596 = vmatprep.subr.mxu0 0.0
        %597 = vmatpush1.msra.mxu0 0.0
        %598 = vmatprep.subr.mxu0 0.0
        %599 = vmatpush1.msra.mxu0 0.0
        %600 = vmatprep.subr.mxu0 0.0
        %601 = vmatpush1.msra.mxu0 0.0
        %602 = vmatprep.subr.mxu0 0.0
        %603 = vmatpush1.msra.mxu0 0.0
        %604 = vmatprep.subr.mxu0 0.0
        %605 = vmatpush1.msra.mxu0 0.0
        %606 = vmatprep.subr.mxu0 0.0
        %607 = vmatpush1.msra.mxu0 0.0
        %608 = vmatprep.subr.mxu0 0.0
        %609 = vmatpush1.msra.mxu0 0.0
        %610 = vmatprep.subr.mxu0 0.0
        %611 = vmatpush1.msra.mxu0 0.0
        %612 = vmatprep.subr.mxu0 0.0
        %613 = vmatpush1.msra.mxu0 0.0
        %614 = vmatprep.subr.mxu0 0.0
        %615 = vmatpush1.msra.mxu0 0.0
        %616 = vmatprep.subr.mxu0 0.0
        %617 = vmatpush1.msra.mxu0 0.0
        %618 = vmatprep.subr.mxu0 0.0
        %619 = vmatpush1.msra.mxu0 0.0
        %620 = vmatprep.subr.mxu0 0.0
        %621 = vmatpush1.msra.mxu0 0.0
        %622 = vmatprep.mubr.f32.mxu0 0.0
        %623 = vmatmul.mubr.f32.gmra.mrb[0].mxu0 %v553
        %v624 = vpop.f32.mrb[0].mxu0
        %v625 = vadd.f32 0.0, %v624
        %v626 = vpop.f32.mrb[0].mxu0
        %627 = vmatprep.mubr.f32.mxu0 0.0
        %628 = vmatmul.mubr.f32.gmra.mrb[0].mxu0 %v556
        %v629 = vpop.f32.mrb[0].mxu0
        %v630 = vadd.f32 0.0, %v629
        %v631 = vpop.f32.mrb[0].mxu0
        %632 = vdwg.mxu0
        %v633 = vrcp.pop %v548
        %v634 = vrcp.pop %v551
        %v635 = vmul.f32 %v548, %v633
        %v636 = vmul.f32 %v551, %v634
        %v637 = vsub.f32 2.0, %v635
        %v638 = vsub.f32 2.0, %v636
        %v639 = vmul.f32 %v633, %v637
        %v640 = vmul.f32 %v634, %v638
        %v641 = vmul.f32 %v625, %v639
        %v642 = vmul.f32 %v630, %v640
        %v643 = vlaneseq
        %v644 = vshrl.u32 %v643, 7
        %v645 = vsub.s32 0, %v644
        %v646 = vrot.slane %v387, %v645
        %v647 = vadd.f32 %v641, %v646
        %v648 = vadd.f32 %v642, %v646
        %v649 = vmax.f32 %v647, 0.0
        %v650 = vmax.f32 %v648, 0.0
        %v651 = vld [vmem:[%s308] sm:$0xff]
        %v652 = vld [vmem:[%s308 + $0x8] sm:$0xff]
        %v653 = vld [vmem:[%s308 + $0x10] sm:$0xff]
        %v654 = vld [vmem:[%s308 + $0x18] sm:$0xff]
        %v655 = vld [vmem:[%s308 + $0x20] sm:$0xff]
        %v656 = vld [vmem:[%s308 + $0x28] sm:$0xff]
        %v657 = vld [vmem:[%s308 + $0x30] sm:$0xff]
        %v658 = vld [vmem:[%s308 + $0x38] sm:$0xff]
        %vm659 = vcmask 523264
        %v661 = vsel %vm659, %v649, 0
        %v664 = vsel %vm659, %v650, 0
        %666 = vmatprep.subr.mxu0 0.0
        %667 = vmatpush1.msra.mxu0 %v651
        %668 = vmatprep.subr.mxu0 0.0
        %669 = vmatpush1.msra.mxu0 %v652
        %670 = vmatprep.subr.mxu0 0.0
        %671 = vmatpush1.msra.mxu0 %v653
        %672 = vmatprep.subr.mxu0 0.0
        %673 = vmatpush1.msra.mxu0 %v654
        %674 = vmatprep.subr.mxu0 0.0
        %675 = vmatpush1.msra.mxu0 %v655
        %676 = vmatprep.subr.mxu0 0.0
        %677 = vmatpush1.msra.mxu0 %v656
        %678 = vmatprep.subr.mxu0 0.0
        %679 = vmatpush1.msra.mxu0 %v657
        %680 = vmatprep.subr.mxu0 0.0
        %681 = vmatpush1.msra.mxu0 %v658
        %682 = vmatprep.subr.mxu0 0.0
        %683 = vmatpush1.msra.mxu0 0.0
        %684 = vmatprep.subr.mxu0 0.0
        %685 = vmatpush1.msra.mxu0 0.0
        %686 = vmatprep.subr.mxu0 0.0
        %687 = vmatpush1.msra.mxu0 0.0
        %688 = vmatprep.subr.mxu0 0.0
        %689 = vmatpush1.msra.mxu0 0.0
        %690 = vmatprep.subr.mxu0 0.0
        %691 = vmatpush1.msra.mxu0 0.0
        %692 = vmatprep.subr.mxu0 0.0
        %693 = vmatpush1.msra.mxu0 0.0
        %694 = vmatprep.subr.mxu0 0.0
        %695 = vmatpush1.msra.mxu0 0.0
        %696 = vmatprep.subr.mxu0 0.0
        %697 = vmatpush1.msra.mxu0 0.0
        %698 = vmatprep.subr.mxu0 0.0
        %699 = vmatpush1.msra.mxu0 0.0
        %700 = vmatprep.subr.mxu0 0.0
        %701 = vmatpush1.msra.mxu0 0.0
        %702 = vmatprep.subr.mxu0 0.0
        %703 = vmatpush1.msra.mxu0 0.0
        %704 = vmatprep.subr.mxu0 0.0
        %705 = vmatpush1.msra.mxu0 0.0
        %706 = vmatprep.subr.mxu0 0.0
        %707 = vmatpush1.msra.mxu0 0.0
        %708 = vmatprep.subr.mxu0 0.0
        %709 = vmatpush1.msra.mxu0 0.0
        %710 = vmatprep.subr.mxu0 0.0
        %711 = vmatpush1.msra.mxu0 0.0
        %712 = vmatprep.subr.mxu0 0.0
        %713 = vmatpush1.msra.mxu0 0.0
        %714 = vmatprep.subr.mxu0 0.0
        %715 = vmatpush1.msra.mxu0 0.0
        %716 = vmatprep.subr.mxu0 0.0
        %717 = vmatpush1.msra.mxu0 0.0
        %718 = vmatprep.subr.mxu0 0.0
        %719 = vmatpush1.msra.mxu0 0.0
        %720 = vmatprep.subr.mxu0 0.0
        %721 = vmatpush1.msra.mxu0 0.0
        %722 = vmatprep.subr.mxu0 0.0
        %723 = vmatpush1.msra.mxu0 0.0
        %724 = vmatprep.subr.mxu0 0.0
        %725 = vmatpush1.msra.mxu0 0.0
        %726 = vmatprep.subr.mxu0 0.0
        %727 = vmatpush1.msra.mxu0 0.0
        %728 = vmatprep.subr.mxu0 0.0
        %729 = vmatpush1.msra.mxu0 0.0
        %730 = vmatprep.mubr.f32.mxu0 0.0
        %731 = vmatmul.mubr.f32.gmra.mrb[0].mxu0 %v661
        %v732 = vpop.f32.mrb[0].mxu0
        %v733 = vadd.f32 0.0, %v732
        %v734 = vpop.f32.mrb[0].mxu0
        %735 = vmatprep.mubr.f32.mxu0 0.0
        %736 = vmatmul.mubr.f32.gmra.mrb[0].mxu0 %v664
        %v737 = vpop.f32.mrb[0].mxu0
        %v738 = vadd.f32 0.0, %v737
        %v739 = vpop.f32.mrb[0].mxu0
        %740 = vdwg.mxu0
        %743 = vrot.lane.b32.xlu0 %v733, 63
        %v744 = vpop.permute.xlu0 %743
        %745 = vrot.lane.b32.xlu0 %v738, 63
        %v746 = vpop.permute.xlu0 %745
        %749 = vxpose.xlu0.b32.start [1/16] %v744, 128
        %750 = vxpose.xlu0.b32.cont [2/16] %v746, 128
        %751 = vxpose.xlu0.b32.cont [3/16] 0.0, 128
        %752 = vxpose.xlu0.b32.cont [4/16] 0.0, 128
        %753 = vxpose.xlu0.b32.cont [5/16] 0.0, 128
        %754 = vxpose.xlu0.b32.cont [6/16] 0.0, 128
        %755 = vxpose.xlu0.b32.cont [7/16] 0.0, 128
        %756 = vxpose.xlu0.b32.cont [8/16] 0.0, 128
        %757 = vxpose.xlu0.b32.cont [9/16] 0.0, 128
        %758 = vxpose.xlu0.b32.cont [10/16] 0.0, 128
        %759 = vxpose.xlu0.b32.cont [11/16] 0.0, 128
        %760 = vxpose.xlu0.b32.cont [12/16] 0.0, 128
        %761 = vxpose.xlu0.b32.cont [13/16] 0.0, 128
        %762 = vxpose.xlu0.b32.cont [14/16] 0.0, 128
        %763 = vxpose.xlu0.b32.cont [15/16] 0.0, 128
        %764 = vxpose.xlu0.b32.end [16/16] 0.0, 128
        %v765 = vpop.trf.xlu0
        %v766 = vpop.trf.xlu0
        %v767 = vpop.trf.xlu0
        %v768 = vpop.trf.xlu0
        %v769 = vpop.trf.xlu0
        %v770 = vpop.trf.xlu0
        %v771 = vpop.trf.xlu0
        %v772 = vpop.trf.xlu0
        %v773 = vpop.trf.xlu0
        %v774 = vpop.trf.xlu0
        %v775 = vpop.trf.xlu0
        %v776 = vpop.trf.xlu0
        %v777 = vpop.trf.xlu0
        %v778 = vpop.trf.xlu0
        %v779 = vpop.trf.xlu0
        %v780 = vpop.trf.xlu0
        %781 = vset.pattern.permute.xlu0 64
        %782 = vperm.xlu0 %781, %v733
        %v783 = vpop.permute.xlu0 %782
        %785 = vset.pattern.permute.xlu0 64
        %786 = vperm.xlu0 %785, %v738
        %v787 = vpop.permute.xlu0 %786
        %v789 = vlaneseq
        %v790 = vshrl.u32 %v789, 7
        %v791 = vsub.s32 0, %v790
        %v792 = vrot.slane %v765, %v791
        %v793 = vadd.f32 %v783, %v792
        %v794 = vadd.f32 %v787, %v792
        %v795 = vmul.f32 %v793, 0.2
        %v796 = vmul.f32 %v794, 0.2
        %v797 = vmax.f32 %v793, %v795
        %v798 = vmax.f32 %v794, %v796
        %v799 = vsel %vm385, %v797, -1e+30
        %v800 = vsel %vm386, %v798, -1e+30
        %v801 = vsel %vm531, %v799, -inf
        %802 = vmax.xlane.f32.xlu0 %v801
        %v803 = vpop.xlane.xlu0 %802
        %v804 = vsel %vm531, %v800, -inf
        %805 = vmax.xlane.f32.xlu0 %v804
        %v806 = vpop.xlane.xlu0 %805
        %v807 = vsub.f32 %v799, %v803
        %v808 = vsub.f32 %v800, %v806
        %v809 = vmul.f32 %v807, 1.442695
        %v810 = vpow.pop %v809
        %v811 = vmul.f32 %v808, 1.442695
        %v812 = vpow.pop %v811
        %v813 = vmul.f32 %v383, %v810
        %v814 = vmul.f32 %v384, %v812
        %v815 = vsel %vm531, %v813, 0.0
        %816 = vadd.xlane.f32.xlu0 %v815
        %v817 = vpop.xlane.xlu0 %816
        %v818 = vsel %vm531, %v814, 0.0
        %819 = vadd.xlane.f32.xlu0 %v818
        %v820 = vpop.xlane.xlu0 %819
        %v822 = vsel %vm531, %v813, 0
        %v825 = vsel %vm531, %v814, 0
        %827 = vmatprep.subr.mxu0 0.0
        %828 = vmatpush1.msra.mxu0 %v733
        %829 = vmatprep.subr.mxu0 0.0
        %830 = vmatpush1.msra.mxu0 %v738
        %831 = vmatprep.subr.mxu0 0.0
        %832 = vmatpush1.msra.mxu0 0.0
        %833 = vmatprep.subr.mxu0 0.0
        %834 = vmatpush1.msra.mxu0 0.0
        %835 = vmatprep.subr.mxu0 0.0
        %836 = vmatpush1.msra.mxu0 0.0
        %837 = vmatprep.subr.mxu0 0.0
        %838 = vmatpush1.msra.mxu0 0.0
        %839 = vmatprep.subr.mxu0 0.0
        %840 = vmatpush1.msra.mxu0 0.0
        %841 = vmatprep.subr.mxu0 0.0
        %842 = vmatpush1.msra.mxu0 0.0
        %843 = vmatprep.subr.mxu0 0.0
        %844 = vmatpush1.msra.mxu0 0.0
        %845 = vmatprep.subr.mxu0 0.0
        %846 = vmatpush1.msra.mxu0 0.0
        %847 = vmatprep.subr.mxu0 0.0
        %848 = vmatpush1.msra.mxu0 0.0
        %849 = vmatprep.subr.mxu0 0.0
        %850 = vmatpush1.msra.mxu0 0.0
        %851 = vmatprep.subr.mxu0 0.0
        %852 = vmatpush1.msra.mxu0 0.0
        %853 = vmatprep.subr.mxu0 0.0
        %854 = vmatpush1.msra.mxu0 0.0
        %855 = vmatprep.subr.mxu0 0.0
        %856 = vmatpush1.msra.mxu0 0.0
        %857 = vmatprep.subr.mxu0 0.0
        %858 = vmatpush1.msra.mxu0 0.0
        %859 = vmatprep.subr.mxu0 0.0
        %860 = vmatpush1.msra.mxu0 0.0
        %861 = vmatprep.subr.mxu0 0.0
        %862 = vmatpush1.msra.mxu0 0.0
        %863 = vmatprep.subr.mxu0 0.0
        %864 = vmatpush1.msra.mxu0 0.0
        %865 = vmatprep.subr.mxu0 0.0
        %866 = vmatpush1.msra.mxu0 0.0
        %867 = vmatprep.subr.mxu0 0.0
        %868 = vmatpush1.msra.mxu0 0.0
        %869 = vmatprep.subr.mxu0 0.0
        %870 = vmatpush1.msra.mxu0 0.0
        %871 = vmatprep.subr.mxu0 0.0
        %872 = vmatpush1.msra.mxu0 0.0
        %873 = vmatprep.subr.mxu0 0.0
        %874 = vmatpush1.msra.mxu0 0.0
        %875 = vmatprep.subr.mxu0 0.0
        %876 = vmatpush1.msra.mxu0 0.0
        %877 = vmatprep.subr.mxu0 0.0
        %878 = vmatpush1.msra.mxu0 0.0
        %879 = vmatprep.subr.mxu0 0.0
        %880 = vmatpush1.msra.mxu0 0.0
        %881 = vmatprep.subr.mxu0 0.0
        %882 = vmatpush1.msra.mxu0 0.0
        %883 = vmatprep.subr.mxu0 0.0
        %884 = vmatpush1.msra.mxu0 0.0
        %885 = vmatprep.subr.mxu0 0.0
        %886 = vmatpush1.msra.mxu0 0.0
        %887 = vmatprep.subr.mxu0 0.0
        %888 = vmatpush1.msra.mxu0 0.0
        %889 = vmatprep.subr.mxu0 0.0
        %890 = vmatpush1.msra.mxu0 0.0
        %891 = vmatprep.mubr.f32.mxu0 0.0
        %892 = vmatmul.mubr.f32.gmra.mrb[0].mxu0 %v822
        %v893 = vpop.f32.mrb[0].mxu0
        %v894 = vadd.f32 0.0, %v893
        %v895 = vpop.f32.mrb[0].mxu0
        %896 = vmatprep.mubr.f32.mxu0 0.0
        %897 = vmatmul.mubr.f32.gmra.mrb[0].mxu0 %v825
        %v898 = vpop.f32.mrb[0].mxu0
        %v899 = vadd.f32 0.0, %v898
        %v900 = vpop.f32.mrb[0].mxu0
        %901 = vdwg.mxu0
        %v902 = vrcp.pop %v817
        %v903 = vrcp.pop %v820
        %v904 = vmul.f32 %v817, %v902
        %v905 = vmul.f32 %v820, %v903
        %v906 = vsub.f32 2.0, %v904
        %v907 = vsub.f32 2.0, %v905
        %v908 = vmul.f32 %v902, %v906
        %v909 = vmul.f32 %v903, %v907
        %v910 = vmul.f32 %v894, %v908
        %v911 = vmul.f32 %v899, %v909
        %v912 = vlaneseq
        %v913 = vshrl.u32 %v912, 7
        %v914 = vsub.s32 1, %v913
        %v915 = vrot.slane %v387, %v914
        %v916 = vadd.f32 %v910, %v915
        %v917 = vadd.f32 %v911, %v915
        %v918 = vmax.f32 %v916, 0.0
        %v919 = vmax.f32 %v917, 0.0
        %v920 = vld [vmem:[%s317] sm:$0xff]
        %v921 = vld [vmem:[%s317 + $0x8] sm:$0xff]
        %v922 = vld [vmem:[%s317 + $0x10] sm:$0xff]
        %v923 = vld [vmem:[%s317 + $0x18] sm:$0xff]
        %v924 = vld [vmem:[%s317 + $0x20] sm:$0xff]
        %v925 = vld [vmem:[%s317 + $0x28] sm:$0xff]
        %v926 = vld [vmem:[%s317 + $0x30] sm:$0xff]
        %v927 = vld [vmem:[%s317 + $0x38] sm:$0xff]
        %v929 = vsel %vm659, %v918, 0
        %v932 = vsel %vm659, %v919, 0
        %934 = vmatprep.subr.mxu0 0.0
        %935 = vmatpush1.msra.mxu0 %v920
        %936 = vmatprep.subr.mxu0 0.0
        %937 = vmatpush1.msra.mxu0 %v921
        %938 = vmatprep.subr.mxu0 0.0
        %939 = vmatpush1.msra.mxu0 %v922
        %940 = vmatprep.subr.mxu0 0.0
        %941 = vmatpush1.msra.mxu0 %v923
        %942 = vmatprep.subr.mxu0 0.0
        %943 = vmatpush1.msra.mxu0 %v924
        %944 = vmatprep.subr.mxu0 0.0
        %945 = vmatpush1.msra.mxu0 %v925
        %946 = vmatprep.subr.mxu0 0.0
        %947 = vmatpush1.msra.mxu0 %v926
        %948 = vmatprep.subr.mxu0 0.0
        %949 = vmatpush1.msra.mxu0 %v927
        %950 = vmatprep.subr.mxu0 0.0
        %951 = vmatpush1.msra.mxu0 0.0
        %952 = vmatprep.subr.mxu0 0.0
        %953 = vmatpush1.msra.mxu0 0.0
        %954 = vmatprep.subr.mxu0 0.0
        %955 = vmatpush1.msra.mxu0 0.0
        %956 = vmatprep.subr.mxu0 0.0
        %957 = vmatpush1.msra.mxu0 0.0
        %958 = vmatprep.subr.mxu0 0.0
        %959 = vmatpush1.msra.mxu0 0.0
        %960 = vmatprep.subr.mxu0 0.0
        %961 = vmatpush1.msra.mxu0 0.0
        %962 = vmatprep.subr.mxu0 0.0
        %963 = vmatpush1.msra.mxu0 0.0
        %964 = vmatprep.subr.mxu0 0.0
        %965 = vmatpush1.msra.mxu0 0.0
        %966 = vmatprep.subr.mxu0 0.0
        %967 = vmatpush1.msra.mxu0 0.0
        %968 = vmatprep.subr.mxu0 0.0
        %969 = vmatpush1.msra.mxu0 0.0
        %970 = vmatprep.subr.mxu0 0.0
        %971 = vmatpush1.msra.mxu0 0.0
        %972 = vmatprep.subr.mxu0 0.0
        %973 = vmatpush1.msra.mxu0 0.0
        %974 = vmatprep.subr.mxu0 0.0
        %975 = vmatpush1.msra.mxu0 0.0
        %976 = vmatprep.subr.mxu0 0.0
        %977 = vmatpush1.msra.mxu0 0.0
        %978 = vmatprep.subr.mxu0 0.0
        %979 = vmatpush1.msra.mxu0 0.0
        %980 = vmatprep.subr.mxu0 0.0
        %981 = vmatpush1.msra.mxu0 0.0
        %982 = vmatprep.subr.mxu0 0.0
        %983 = vmatpush1.msra.mxu0 0.0
        %984 = vmatprep.subr.mxu0 0.0
        %985 = vmatpush1.msra.mxu0 0.0
        %986 = vmatprep.subr.mxu0 0.0
        %987 = vmatpush1.msra.mxu0 0.0
        %988 = vmatprep.subr.mxu0 0.0
        %989 = vmatpush1.msra.mxu0 0.0
        %990 = vmatprep.subr.mxu0 0.0
        %991 = vmatpush1.msra.mxu0 0.0
        %992 = vmatprep.subr.mxu0 0.0
        %993 = vmatpush1.msra.mxu0 0.0
        %994 = vmatprep.subr.mxu0 0.0
        %995 = vmatpush1.msra.mxu0 0.0
        %996 = vmatprep.subr.mxu0 0.0
        %997 = vmatpush1.msra.mxu0 0.0
        %998 = vmatprep.mubr.f32.mxu0 0.0
        %999 = vmatmul.mubr.f32.gmra.mrb[0].mxu0 %v929
        %v1000 = vpop.f32.mrb[0].mxu0
        %v1001 = vadd.f32 0.0, %v1000
        %v1002 = vpop.f32.mrb[0].mxu0
        %1003 = vmatprep.mubr.f32.mxu0 0.0
        %1004 = vmatmul.mubr.f32.gmra.mrb[0].mxu0 %v932
        %v1005 = vpop.f32.mrb[0].mxu0
        %v1006 = vadd.f32 0.0, %v1005
        %v1007 = vpop.f32.mrb[0].mxu0
        %1008 = vdwg.mxu0
        %1011 = vrot.lane.b32.xlu0 %v1001, 63
        %v1012 = vpop.permute.xlu0 %1011
        %1013 = vrot.lane.b32.xlu0 %v1006, 63
        %v1014 = vpop.permute.xlu0 %1013
        %1017 = vxpose.xlu0.b32.start [1/16] %v1012, 128
        %1018 = vxpose.xlu0.b32.cont [2/16] %v1014, 128
        %1019 = vxpose.xlu0.b32.cont [3/16] 0.0, 128
        %1020 = vxpose.xlu0.b32.cont [4/16] 0.0, 128
        %1021 = vxpose.xlu0.b32.cont [5/16] 0.0, 128
        %1022 = vxpose.xlu0.b32.cont [6/16] 0.0, 128
        %1023 = vxpose.xlu0.b32.cont [7/16] 0.0, 128
        %1024 = vxpose.xlu0.b32.cont [8/16] 0.0, 128
        %1025 = vxpose.xlu0.b32.cont [9/16] 0.0, 128
        %1026 = vxpose.xlu0.b32.cont [10/16] 0.0, 128
        %1027 = vxpose.xlu0.b32.cont [11/16] 0.0, 128
        %1028 = vxpose.xlu0.b32.cont [12/16] 0.0, 128
        %1029 = vxpose.xlu0.b32.cont [13/16] 0.0, 128
        %1030 = vxpose.xlu0.b32.cont [14/16] 0.0, 128
        %1031 = vxpose.xlu0.b32.cont [15/16] 0.0, 128
        %1032 = vxpose.xlu0.b32.end [16/16] 0.0, 128
        %v1033 = vpop.trf.xlu0
        %v1034 = vpop.trf.xlu0
        %v1035 = vpop.trf.xlu0
        %v1036 = vpop.trf.xlu0
        %v1037 = vpop.trf.xlu0
        %v1038 = vpop.trf.xlu0
        %v1039 = vpop.trf.xlu0
        %v1040 = vpop.trf.xlu0
        %v1041 = vpop.trf.xlu0
        %v1042 = vpop.trf.xlu0
        %v1043 = vpop.trf.xlu0
        %v1044 = vpop.trf.xlu0
        %v1045 = vpop.trf.xlu0
        %v1046 = vpop.trf.xlu0
        %v1047 = vpop.trf.xlu0
        %v1048 = vpop.trf.xlu0
        %1049 = vset.pattern.permute.xlu0 64
        %1050 = vperm.xlu0 %1049, %v1001
        %v1051 = vpop.permute.xlu0 %1050
        %1053 = vset.pattern.permute.xlu0 64
        %1054 = vperm.xlu0 %1053, %v1006
        %v1055 = vpop.permute.xlu0 %1054
        %v1057 = vlaneseq
        %v1058 = vshrl.u32 %v1057, 7
        %v1059 = vsub.s32 0, %v1058
        %v1060 = vrot.slane %v1033, %v1059
        %v1061 = vadd.f32 %v1051, %v1060
        %v1062 = vadd.f32 %v1055, %v1060
        %v1063 = vmul.f32 %v1061, 0.2
        %v1064 = vmul.f32 %v1062, 0.2
        %v1065 = vmax.f32 %v1061, %v1063
        %v1066 = vmax.f32 %v1062, %v1064
        %v1067 = vsel %vm385, %v1065, -1e+30
        %v1068 = vsel %vm386, %v1066, -1e+30
        %v1069 = vsel %vm531, %v1067, -inf
        %1070 = vmax.xlane.f32.xlu0 %v1069
        %v1071 = vpop.xlane.xlu0 %1070
        %v1072 = vsel %vm531, %v1068, -inf
        %1073 = vmax.xlane.f32.xlu0 %v1072
        %v1074 = vpop.xlane.xlu0 %1073
        %v1075 = vsub.f32 %v1067, %v1071
        %v1076 = vsub.f32 %v1068, %v1074
        %v1077 = vmul.f32 %v1075, 1.442695
        %v1078 = vpow.pop %v1077
        %v1079 = vmul.f32 %v1076, 1.442695
        %v1080 = vpow.pop %v1079
        %v1081 = vmul.f32 %v383, %v1078
        %v1082 = vmul.f32 %v384, %v1080
        %v1083 = vsel %vm531, %v1081, 0.0
        %1084 = vadd.xlane.f32.xlu0 %v1083
        %v1085 = vpop.xlane.xlu0 %1084
        %v1086 = vsel %vm531, %v1082, 0.0
        %1087 = vadd.xlane.f32.xlu0 %v1086
        %v1088 = vpop.xlane.xlu0 %1087
        %v1090 = vsel %vm531, %v1081, 0
        %v1093 = vsel %vm531, %v1082, 0
        %1095 = vmatprep.subr.mxu0 0.0
        %1096 = vmatpush1.msra.mxu0 %v1001
        %1097 = vmatprep.subr.mxu0 0.0
        %1098 = vmatpush1.msra.mxu0 %v1006
        %1099 = vmatprep.subr.mxu0 0.0
        %1100 = vmatpush1.msra.mxu0 0.0
        %1101 = vmatprep.subr.mxu0 0.0
        %1102 = vmatpush1.msra.mxu0 0.0
        %1103 = vmatprep.subr.mxu0 0.0
        %1104 = vmatpush1.msra.mxu0 0.0
        %1105 = vmatprep.subr.mxu0 0.0
        %1106 = vmatpush1.msra.mxu0 0.0
        %1107 = vmatprep.subr.mxu0 0.0
        %1108 = vmatpush1.msra.mxu0 0.0
        %1109 = vmatprep.subr.mxu0 0.0
        %1110 = vmatpush1.msra.mxu0 0.0
        %1111 = vmatprep.subr.mxu0 0.0
        %1112 = vmatpush1.msra.mxu0 0.0
        %1113 = vmatprep.subr.mxu0 0.0
        %1114 = vmatpush1.msra.mxu0 0.0
        %1115 = vmatprep.subr.mxu0 0.0
        %1116 = vmatpush1.msra.mxu0 0.0
        %1117 = vmatprep.subr.mxu0 0.0
        %1118 = vmatpush1.msra.mxu0 0.0
        %1119 = vmatprep.subr.mxu0 0.0
        %1120 = vmatpush1.msra.mxu0 0.0
        %1121 = vmatprep.subr.mxu0 0.0
        %1122 = vmatpush1.msra.mxu0 0.0
        %1123 = vmatprep.subr.mxu0 0.0
        %1124 = vmatpush1.msra.mxu0 0.0
        %1125 = vmatprep.subr.mxu0 0.0
        %1126 = vmatpush1.msra.mxu0 0.0
        %1127 = vmatprep.subr.mxu0 0.0
        %1128 = vmatpush1.msra.mxu0 0.0
        %1129 = vmatprep.subr.mxu0 0.0
        %1130 = vmatpush1.msra.mxu0 0.0
        %1131 = vmatprep.subr.mxu0 0.0
        %1132 = vmatpush1.msra.mxu0 0.0
        %1133 = vmatprep.subr.mxu0 0.0
        %1134 = vmatpush1.msra.mxu0 0.0
        %1135 = vmatprep.subr.mxu0 0.0
        %1136 = vmatpush1.msra.mxu0 0.0
        %1137 = vmatprep.subr.mxu0 0.0
        %1138 = vmatpush1.msra.mxu0 0.0
        %1139 = vmatprep.subr.mxu0 0.0
        %1140 = vmatpush1.msra.mxu0 0.0
        %1141 = vmatprep.subr.mxu0 0.0
        %1142 = vmatpush1.msra.mxu0 0.0
        %1143 = vmatprep.subr.mxu0 0.0
        %1144 = vmatpush1.msra.mxu0 0.0
        %1145 = vmatprep.subr.mxu0 0.0
        %1146 = vmatpush1.msra.mxu0 0.0
        %1147 = vmatprep.subr.mxu0 0.0
        %1148 = vmatpush1.msra.mxu0 0.0
        %1149 = vmatprep.subr.mxu0 0.0
        %1150 = vmatpush1.msra.mxu0 0.0
        %1151 = vmatprep.subr.mxu0 0.0
        %1152 = vmatpush1.msra.mxu0 0.0
        %1153 = vmatprep.subr.mxu0 0.0
        %1154 = vmatpush1.msra.mxu0 0.0
        %1155 = vmatprep.subr.mxu0 0.0
        %1156 = vmatpush1.msra.mxu0 0.0
        %1157 = vmatprep.subr.mxu0 0.0
        %1158 = vmatpush1.msra.mxu0 0.0
        %1159 = vmatprep.mubr.f32.mxu0 0.0
        %1160 = vmatmul.mubr.f32.gmra.mrb[0].mxu0 %v1090
        %v1161 = vpop.f32.mrb[0].mxu0
        %v1162 = vadd.f32 0.0, %v1161
        %v1163 = vpop.f32.mrb[0].mxu0
        %1164 = vmatprep.mubr.f32.mxu0 0.0
        %1165 = vmatmul.mubr.f32.gmra.mrb[0].mxu0 %v1093
        %v1166 = vpop.f32.mrb[0].mxu0
        %v1167 = vadd.f32 0.0, %v1166
        %v1168 = vpop.f32.mrb[0].mxu0
        %1169 = vdwg.mxu0
        %v1170 = vrcp.pop %v1085
        %v1171 = vrcp.pop %v1088
        %v1172 = vmul.f32 %v1085, %v1170
        %v1173 = vmul.f32 %v1088, %v1171
        %v1174 = vsub.f32 2.0, %v1172
        %v1175 = vsub.f32 2.0, %v1173
        %v1176 = vmul.f32 %v1170, %v1174
        %v1177 = vmul.f32 %v1171, %v1175
        %v1178 = vmul.f32 %v1162, %v1176
        %v1179 = vmul.f32 %v1167, %v1177
        %v1180 = vlaneseq
        %v1181 = vshrl.u32 %v1180, 7
        %v1182 = vsub.s32 2, %v1181
        %v1183 = vrot.slane %v387, %v1182
        %v1184 = vadd.f32 %v1178, %v1183
        %v1185 = vadd.f32 %v1179, %v1183
        %1186 = vst.msk [vmem:[%s372] sm:$0xff] %vm659, %v1184
        %1187 = vst.msk [vmem:[%s372 + $0x8] sm:$0xff] %vm659, %v1185
        %s1188 = sand.u32 %s185, 1
        %s1189 = scalar_lea.sflag [#allocation4], %s1188
        %s1190 = sand.u32 %s185, 1
        %s1191 = smul.addr %s1190, 16
        %s1192 = scalar_lea.vmem [#allocation8], %s1191
        // Predicated region
        $region57: #{tpu_custom_call.1} parent=43 // pred_check
          %p1193 = pneg %p195
        $region58: #{tpu_custom_call.1} parent=43 // pred_check_branch
          %1195 = sbr.rel (%p1193) target = $region60
        $region59: #{tpu_custom_call.1} parent=43 // pred_region
          %s1197 = ssub.s32 256, 256
          %1198 = vsyncadd %s1189, %s1197
          %s1199 = smul.addr %s26, 2
          %s1200 = smul.addr %s1199, 128
          %s1201 = scalar_lea.hbm %s6, %s1200
          %s1202 = sshll.u32 %s1192, 4
          %s1203 = int_to_ptr.vmem [resolvable:$true] %s1202
          %1208 = dma.vmem_to_hbm [thread:$0]  %s1203, 256, %s1201, %s1189, 128, 128, 8
        $region60: #{tpu_custom_call.1} parent=43 // pred_fallthru
          _
      $region44: #{tpu_custom_call.1} parent=5 // pred_fallthru
        _
      %p1209 = scmp.le.s32.totalorder 2, %s21
      // Predicated region
      $region61: #{tpu_custom_call.1} parent=5 // pred_check
        %p1210 = pneg %p1209
      $region62: #{tpu_custom_call.1} parent=5 // pred_check_branch
        %1212 = sbr.rel (%p1210) target = $region64
      $region63: #{tpu_custom_call.1} parent=5 // pred_region
        %s1213 = ssub.s32 %s21, 2
        // Predicated region
        $region65: #{tpu_custom_call.1} parent=63 // pred_check
          %p1214 = pneg %p201
        $region66: #{tpu_custom_call.1} parent=63 // pred_check_branch
          %1216 = sbr.rel (%p1214) target = $region68
        $region67: #{tpu_custom_call.1} parent=63 // pred_region
          %s1217 = sand.u32 %s186, 1
          %s1218 = scalar_lea.sflag [#allocation4], %s1217
          %s1219 = sand.u32 %s186, 1
          %s1220 = smul.addr %s1219, 16
          %s1221 = scalar_lea.vmem [#allocation8], %s1220
          %1222 = dma.done %s1218, 256
        $region68: #{tpu_custom_call.1} parent=63 // pred_fallthru
          _
      $region64: #{tpu_custom_call.1} parent=5 // pred_fallthru
        _
    $region6: #{tpu_custom_call.1} parent=1 // loop_footer
      %s25 = sadd.s32 1, %s21
    $region7: #{tpu_custom_call.1} parent=1 // loop_footer_branch
      %20 = sbr.rel target = $region3
    $region8: #{tpu_custom_call.1} parent=1 // loop_exit
      _
    %1223 = vsyncpa [#allocation3], 1
    %s1224 = scalar_lea.sflag [#allocation3], 1
    %1225 = vsyncpa %s1224, 1
    %1226 = vsyncpa [#allocation6], 1
    %s1227 = scalar_lea.sflag [#allocation6], 1
    %1228 = vsyncpa %s1227, 1
    %1229 = vsyncpa [#allocation4], 1
    %s1230 = scalar_lea.sflag [#allocation4], 1
    %1231 = vsyncpa %s1230, 1

</llo_original>
